<compile_context>
chip_gen: v5e
topology: v5e:2x2
jax: 0.10.0
libtpu: 0.0.40
codegen_flags: <defaults>
</compile_context>

<pallas_src>
import math

import jax
import jax.numpy as jnp
from jax.experimental import pallas as pl
from jax.experimental.pallas import tpu as pltpu

EPS = 1e-5


def _round_up(v, m):
    return -(-v // m) * m


def _round_down(v, m):
    return (v // m) * m


def _mod_kernel(gb_ref, nx_ref, out_ref):
    """out = gamma * nx + beta  (per-row gamma/beta, lane-broadcast FMA).

    gb_ref          : (bm, 2)  float32   [:, 0:1] = gamma, [:, 1:2] = beta
    nx_ref, out_ref : (bm, bn) activation dtype
    """
    nx = nx_ref[...].astype(jnp.float32)
    gamma = gb_ref[:, 0:1]
    beta = gb_ref[:, 1:2]
    out_ref[...] = (gamma * nx + beta).astype(out_ref.dtype)


def _pick_tiles(rows, cols, itemsize, target_bytes, block_rows, block_cols):
    """Choose (bm, bn): sublane-aligned rows, lane-dense cols, ~target_bytes tile."""
    # Lane (last) dim: full dim when it fits one vreg row, else a multiple of
    # 128 bounded by the tile budget (unmasked stores except on the ragged
    # final block).
    if cols <= 128:
        bn = cols
    else:
        bn_cap = max(128, _round_down(target_bytes // (8 * itemsize), 128))
        bn = min(_round_up(cols, 128), bn_cap)
        if block_cols is not None:
            bn = min(bn, max(128, _round_up(block_cols, 128)))
    # Sublane dim: full dim or a multiple of 8 bounded by what's left of the
    # tile budget.
    if rows <= 8:
        bm = rows
    else:
        bm_cap = max(8, _round_down(max(target_bytes // (bn * itemsize), 8), 8))
        bm = min(_round_up(rows, 8), bm_cap)
        if block_rows is not None:
            bm = min(bm, max(8, _round_up(block_rows, 8)))
    # Megacore (v7x): make sure at least one "parallel" axis has >= 2 blocks so
    # both TensorCores get work; harmless on single-TC chips.
    if pl.cdiv(rows, bm) * pl.cdiv(cols, bn) < 2:
        if rows > 8 and bm > 8:
            bm = min(bm, max(8, _round_up(pl.cdiv(rows, 2), 8)))
        elif cols > 128 and bn > 128:
            bn = min(bn, max(128, _round_up(pl.cdiv(cols, 2), 128)))
    return bm, bn


def global_style_transformer(normed_x, t, x, w_gate, b_gate, w_gt, b_gt,
                             *, block_rows=None, block_cols=None,
                             tile_target_bytes=4 * 1024 * 1024):
    """global_styler forward.

    normed_x : (N, C, H, W)  activations to modulate ("out" in the module)
    x        : (N, C, H, W)  stats source (kwargs['x'])
    t        : (N, T)        text feature
    w_gate, w_gt : (2C, T)   EqualLinear weights (equal_lr scale pre-applied)
    b_gate, b_gt : (2C, 1)   biases
    """
    N, C, H, W = x.shape
    HW = H * W
    assert HW > 1, "unbiased variance (ddof=1) requires H*W > 1"
    out_dtype = normed_x.dtype

    # ---- hoisted text heads: one fused (N,T)x(T,4C) GEMM + sigmoid --------
    w_all = jnp.concatenate([w_gate, w_gt], axis=0).astype(jnp.float32)      # (4C, T)
    b_all = jnp.concatenate([b_gate[:, 0], b_gt[:, 0]], axis=0).astype(jnp.float32)
    heads = t.astype(jnp.float32) @ w_all.T + b_all                          # (N, 4C)
    gate = jax.nn.sigmoid(heads[:, : 2 * C])
    style = heads[:, 2 * C:]
    std_gate, mu_gate = gate[:, :C], gate[:, C:]
    gamma0, beta0 = style[:, :C], style[:, C:]

    # ---- per-(N,C) stats of x: f32 accumulation, no materialized f32 copy --
    xr = x.reshape(N, C, HW)
    sum_x = jnp.sum(xr, axis=2, dtype=jnp.float32)                           # (N, C)
    sum_x2 = jnp.sum(jnp.square(xr.astype(jnp.float32)), axis=2)             # fused convert
    mu = sum_x / HW
    var = jnp.maximum((sum_x2 - mu * sum_x) / (HW - 1), 0.0)                 # unbiased
    std = jnp.sqrt(var + EPS)

    gamma = std_gate * std + gamma0                                          # (N, C) f32
    beta = mu_gate * mu + beta0
    gb = jnp.stack([gamma.reshape(-1), beta.reshape(-1)], axis=1)            # (N*C, 2)
    gb = gb.astype(jnp.float32)

    # ---- fused (N*C, HW) modulation kernel, ragged-tiled, no host pad ------
    rows, cols = N * C, HW
    nx2 = normed_x.reshape(rows, cols)

    itemsize = jnp.dtype(out_dtype).itemsize
    bm, bn = _pick_tiles(rows, cols, itemsize, tile_target_bytes,
                         block_rows, block_cols)
    grid = (pl.cdiv(rows, bm), pl.cdiv(cols, bn))

    tile_bytes = bm * bn * itemsize
    gb_tile_bytes = _round_up(bm, 8) * 128 * 4                 # lane-padded gb buffer
    need = 2 * 2 * tile_bytes + 2 * gb_tile_bytes + (8 << 20)  # dbl-buffered in+out + slack
    vmem_limit = int(min(max(need, 32 << 20), 48 << 20))

    out = pl.pallas_call(
        _mod_kernel,
        out_shape=jax.ShapeDtypeStruct((rows, cols), out_dtype),
        grid_spec=pltpu.PrefetchScalarGridSpec(
            num_scalar_prefetch=0,
            grid=grid,
            in_specs=[
                pl.BlockSpec((bm, 2), lambda i, j: (i, 0)),    # packed gamma/beta
                pl.BlockSpec((bm, bn), lambda i, j: (i, j)),   # normed_x tile
            ],
            out_specs=pl.BlockSpec((bm, bn), lambda i, j: (i, j)),
        ),
        compiler_params=pltpu.CompilerParams(
            dimension_semantics=("parallel", "parallel"),
            vmem_limit_bytes=vmem_limit,
        ),
        # TODO(synk): add input_output_aliases={1: 0} when callers donate
        # normed_x; without donation XLA inserts a defensive copy.
    )(gb, nx2)

    return out.reshape(N, C, H, W)


def _reference(normed_x, t, x, w_gate, b_gate, w_gt, b_gt):
    """Pure-JAX mirror of the PyTorch global_styler forward."""
    C = w_gate.shape[0] // 2
    gate = jax.nn.sigmoid(t @ w_gate.T + b_gate[:, 0])            # (N, 2C)
    style = t @ w_gt.T + b_gt[:, 0]                               # (N, 2C)
    std_gate, mu_gate = gate[:, :C], gate[:, C:]
    gamma0, beta0 = style[:, :C], style[:, C:]
    mu = jnp.mean(x, axis=(2, 3), keepdims=True)                  # (N,C,1,1)
    var = jnp.var(x, axis=(2, 3), keepdims=True, ddof=1)
    std = jnp.sqrt(var + EPS)
    gamma = std_gate[:, :, None, None] * std + gamma0[:, :, None, None]
    beta = mu_gate[:, :, None, None] * mu + beta0[:, :, None, None]
    return gamma * normed_x + beta


if __name__ == "__main__":
    def make_inputs(key, N, C, H, W, T):
        k1, k2, k3, k4, k5 = jax.random.split(key, 5)
        eq_scale = math.sqrt(2.0 / T)   # EqualLinear equal_lr scale
        w_gate = jax.random.normal(k1, (2 * C, T), jnp.float32) * eq_scale
        b_gate = jnp.zeros((2 * C, 1), jnp.float32)
        w_gt = jax.random.normal(k2, (2 * C, T), jnp.float32) * eq_scale
        # init_style_weights: bias[:C] = 1, bias[C:] = 0
        b_gt = jnp.concatenate(
            [jnp.ones((C, 1), jnp.float32), jnp.zeros((C, 1), jnp.float32)], axis=0)
        normed_x = jax.random.normal(k3, (N, C, H, W), jnp.float32)
        x = jax.random.normal(k4, (N, C, H, W), jnp.float32)
        t = jax.random.normal(k5, (N, T), jnp.float32)
        return normed_x, t, x, w_gate, b_gate, w_gt, b_gt

    gst = jax.jit(global_style_transformer,
                  static_argnames=("block_rows", "block_cols", "tile_target_bytes"))

    key = jax.random.PRNGKey(0)
    k0, k1, k2 = jax.random.split(key, 3)

    # Case 1: feature_size=4, text_feature_size=32, 16x16 spatial, batch=2.
    args = make_inputs(k0, N=2, C=4, H=16, W=16, T=32)
    ref = _reference(*args)
    out = jax.block_until_ready(gst(*args))                       # auto tiles (megacore split)
    assert out.shape == (2, 4, 16, 16)
    assert jnp.allclose(out, ref, atol=1e-4, rtol=1e-4), "case1 default-tile mismatch"

    out_tiled = jax.block_until_ready(
        gst(*args, block_rows=8, block_cols=128))                 # multi-block grid
    assert jnp.allclose(out_tiled, ref, atol=1e-4, rtol=1e-4), "case1 multi-tile mismatch"

    # Case 2: odd shapes -> ragged final row block + sub-128 lane width.
    args2 = make_inputs(k1, N=3, C=5, H=9, W=7, T=16)
    ref2 = _reference(*args2)
    out2 = jax.block_until_ready(gst(*args2, block_rows=8, block_cols=128))
    assert out2.shape == (3, 5, 9, 7)
    assert jnp.allclose(out2, ref2, atol=1e-4, rtol=1e-4), "case2 mismatch"

    # Case 3: HW not a multiple of the column block -> ragged final col block.
    args3 = make_inputs(k2, N=2, C=4, H=20, W=20, T=32)
    ref3 = _reference(*args3)
    out3 = jax.block_until_ready(gst(*args3))
    assert out3.shape == (2, 4, 20, 20)
    assert jnp.allclose(out3, ref3, atol=1e-4, rtol=1e-4), "case3 mismatch"

    print("KERNEL_OK")
</pallas_src>

<mosaic_0001>
module attributes {stable_mosaic.version = 11 : i64} {
  func.func @_mod_kernel(%arg0: i32, %arg1: i32, %arg2: memref<8x2xf32, #tpu.memory_space<vmem>>, %arg3: memref<8x128xf32, #tpu.memory_space<vmem>>, %arg4: memref<8x128xf32, #tpu.memory_space<vmem>>) attributes {dimension_semantics = [#tpu.dimension_semantics<parallel>, #tpu.dimension_semantics<parallel>], iteration_bounds = array<i64: 1, 2>, scalar_prefetch = 0 : i64, scratch_operands = 0 : i64, tpu.core_type = #tpu.core_type<tc>, window_params = [{transform_indices = @transform_0, window_bounds = array<i64: 8, 2>}, {transform_indices = @transform_1, window_bounds = array<i64: 8, 128>}, {transform_indices = @transform_2, window_bounds = array<i64: 8, 128>}]} {
    %c0 = arith.constant 0 : index
    %c0_0 = arith.constant 0 : index
    %0 = vector.load %arg3[%c0, %c0_0] : memref<8x128xf32, #tpu.memory_space<vmem>>, vector<8x128xf32>
    %c0_1 = arith.constant 0 : index
    %c0_2 = arith.constant 0 : index
    %1 = vector.load %arg2[%c0_1, %c0_2] : memref<8x2xf32, #tpu.memory_space<vmem>>, vector<8x1xf32>
    %c0_3 = arith.constant 0 : index
    %c1 = arith.constant 1 : index
    %2 = vector.load %arg2[%c0_3, %c1] : memref<8x2xf32, #tpu.memory_space<vmem>>, vector<8x1xf32>
    %3 = vector.broadcast %1 : vector<8x1xf32> to vector<8x128xf32>
    %4 = arith.mulf %3, %0 : vector<8x128xf32>
    %5 = vector.broadcast %2 : vector<8x1xf32> to vector<8x128xf32>
    %6 = arith.addf %4, %5 : vector<8x128xf32>
    %c0_4 = arith.constant 0 : index
    %c0_5 = arith.constant 0 : index
    %7 = vector.load %arg4[%c0_4, %c0_5] : memref<8x128xf32, #tpu.memory_space<vmem>>, vector<8x128xf32>
    tpu.vector_store %arg4[%c0_4, %c0_5], %6 {strides = array<i32>} : memref<8x128xf32, #tpu.memory_space<vmem>>, vector<8x128xf32>,
    return
  }
  func.func @transform_0(%arg0: i32, %arg1: i32) -> (i32, i32) {
    %c0_i32 = arith.constant 0 : i32
    %c0_i32_0 = arith.constant 0 : i32
    return %arg0, %c0_i32 : i32, i32
  }
  func.func @transform_1(%arg0: i32, %arg1: i32) -> (i32, i32) {
    %c0_i32 = arith.constant 0 : i32
    return %arg0, %arg1 : i32, i32
  }
  func.func @transform_2(%arg0: i32, %arg1: i32) -> (i32, i32) {
    %c0_i32 = arith.constant 0 : i32
    return %arg0, %arg1 : i32, i32
  }
}

</mosaic_0001>

<llo_original>
// kernel: global_style_transformer.1
$region0: #{global_style_transformer.1}
  #allocation0 [shape = 'u32[]', space=smem, size = 0x4, offset = 0x4, fixed_abs, tag = 'smem constant byte address 0x4 - core index']
  #allocation1 [shape = 'u32[72,128]{1,0:T(1,128)}', space=vmem, size = 0x9000, scoped, tag = 'internal scratch']
  %s0 = inlined_call_operand.vmem [shape: f32[8,2], index: 0, kind: input, shape index: {}]
  %s1 = inlined_call_operand.vmem [shape: f32[8,256], index: 1, kind: input, shape index: {}]
  %s2 = inlined_call_operand.vmem [shape: f32[8,256], index: 2, kind: output, shape index: {}]
  %s3 = sld [smem:[#allocation0]]
  $region41: #{global_style_transformer.1} parent=0
    _
  %s5 = ssub.s32 1, %s3
  %s6 = scalar_select 0, %s5, %s3
  loop: start=0, step=1, limit=4
  $region2: #{global_style_transformer.1} parent=0 // loop_pre_header
    _
  $region3: #{global_style_transformer.1} parent=0 // loop_header
    %s8 = sphi 0, %s12
    %p9 = scmp.ge.s32.totalorder %s8, 4
    %s15 = sphi 0, %s27
    %s16 = sphi 0, %s23
    %s17 = sphi 0, %s15
    %s18 = sphi 0, %s16
    %s19 = sphi 0, %s17
    %s20 = sphi 0, %s18
    %s30 = sphi 0, %s32
    %s33 = sphi 0, %s30
    %s34 = sphi 0, %s33
    %s50 = sphi 0, %s34
    %s58 = sphi 0, %s60
    %s61 = sphi 0, %s58
    %s62 = sphi 0, %s61
    %s78 = sphi 0, %s62
    %s86 = sphi 0, %s88
    %s89 = sphi 0, %s86
    %s90 = sphi 0, %s89
    %s106 = sphi 0, %s90
  $region4: #{global_style_transformer.1} parent=0 // loop_header_branch
    %11 = sbr.rel (%p9) target = $region8
  $region5: #{global_style_transformer.1} parent=0 // loop_body
    %s13 = ssub.s32 %s8, 1
    %s14 = ssub.s32 %s8, 2
    %s21 = sadd.s32 1, %s16
    %p22 = scmp.ge.s32.totalorder %s21, 2
    %s23 = scalar_select %p22, 0, %s21
    %s24 = sadd.s32 1, %s15
    %s25 = scalar_select %p22, %s24, %s15
    %p26 = scmp.ge.s32.totalorder %s25, 1
    %s27 = scalar_select %p26, 0, %s25
    %s28 = ssub.s32 %s15, %s27
    %p29 = scmp.eq.s32.totalorder %s28, 0
    %s31 = sadd.s32 %s30, 1
    %s32 = scalar_select %p29, %s30, %s31
    %p35 = pneg %p29
    %p36 = scmp.eq.s32.totalorder %s8, 1
    %p37 = por %p35, %p36
    %p38 = scmp.ne.s32.totalorder %s30, %s33
    %p39 = scmp.eq.s32.totalorder %s8, 0
    %p40 = por %p38, %p39
    %p41 = scmp.ne.s32.totalorder %s30, %s33
    %p42 = scmp.eq.s32.totalorder %s13, 1
    %p43 = por %p41, %p42
    %p44 = scmp.ne.s32.totalorder %s33, %s34
    %p45 = scmp.eq.s32.totalorder %s13, 0
    %p46 = por %p44, %p45
    %p47 = scmp.ne.s32.totalorder %s33, %s34
    %p48 = scmp.eq.s32.totalorder %s14, 1
    %p49 = por %p47, %p48
    %p51 = scmp.ne.s32.totalorder %s34, %s50
    %p52 = scmp.eq.s32.totalorder %s14, 0
    %p53 = por %p51, %p52
    %s54 = ssub.s32 %s15, %s27
    %s55 = ssub.s32 %s16, %s23
    %s56 = sor.u32 %s54, %s55
    %p57 = scmp.eq.s32.totalorder %s56, 0
    %s59 = sadd.s32 %s58, 1
    %s60 = scalar_select %p57, %s58, %s59
    %p63 = pneg %p57
    %p64 = scmp.eq.s32.totalorder %s8, 1
    %p65 = por %p63, %p64
    %p66 = scmp.ne.s32.totalorder %s58, %s61
    %p67 = scmp.eq.s32.totalorder %s8, 0
    %p68 = por %p66, %p67
    %p69 = scmp.ne.s32.totalorder %s58, %s61
    %p70 = scmp.eq.s32.totalorder %s13, 1
    %p71 = por %p69, %p70
    %p72 = scmp.ne.s32.totalorder %s61, %s62
    %p73 = scmp.eq.s32.totalorder %s13, 0
    %p74 = por %p72, %p73
    %p75 = scmp.ne.s32.totalorder %s61, %s62
    %p76 = scmp.eq.s32.totalorder %s14, 1
    %p77 = por %p75, %p76
    %p79 = scmp.ne.s32.totalorder %s62, %s78
    %p80 = scmp.eq.s32.totalorder %s14, 0
    %p81 = por %p79, %p80
    %s82 = ssub.s32 %s15, %s27
    %s83 = ssub.s32 %s16, %s23
    %s84 = sor.u32 %s82, %s83
    %p85 = scmp.eq.s32.totalorder %s84, 0
    %s87 = sadd.s32 %s86, 1
    %s88 = scalar_select %p85, %s86, %s87
    %p91 = pneg %p85
    %p92 = scmp.eq.s32.totalorder %s8, 1
    %p93 = por %p91, %p92
    %p94 = scmp.ne.s32.totalorder %s86, %s89
    %p95 = scmp.eq.s32.totalorder %s8, 0
    %p96 = por %p94, %p95
    %p97 = scmp.ne.s32.totalorder %s86, %s89
    %p98 = scmp.eq.s32.totalorder %s13, 1
    %p99 = por %p97, %p98
    %p100 = scmp.ne.s32.totalorder %s89, %s90
    %p101 = scmp.eq.s32.totalorder %s13, 0
    %p102 = por %p100, %p101
    %p103 = scmp.ne.s32.totalorder %s89, %s90
    %p104 = scmp.eq.s32.totalorder %s14, 1
    %p105 = por %p103, %p104
    %p107 = scmp.ne.s32.totalorder %s90, %s106
    %p108 = scmp.eq.s32.totalorder %s14, 0
    %p109 = por %p107, %p108
    %p110 = scmp.le.s32.totalorder 1, %s8
    %p111 = scmp.lt.s32.totalorder %s8, 3
    %p112 = pnand %p110, %p111
    %p113 = pneg %p112
    // Predicated region
    $region9: #{global_style_transformer.1} parent=5 // pred_check
      _
    $region10: #{global_style_transformer.1} parent=5 // pred_check_branch
      %115 = sbr.rel (%p112) target = $region12
    $region11: #{global_style_transformer.1} parent=5 // pred_region
      %s116 = ssub.s32 %s8, 1
      // Predicated region
      $region13: #{global_style_transformer.1} parent=11 // pred_check
        %p117 = pneg %p46
      $region14: #{global_style_transformer.1} parent=11 // pred_check_branch
        %119 = sbr.rel (%p117) target = $region16
      $region15: #{global_style_transformer.1} parent=11 // pred_region
        %p120 = scmp.lt.s32.totalorder %s17, 0
        %s121 = scalar_select %p120, %s17, 0
        %s122 = smul.addr %s121, 8
        %s123 = scalar_lea.vmem %s0, %s122
      $region16: #{global_style_transformer.1} parent=11 // pred_fallthru
        _
    $region12: #{global_style_transformer.1} parent=5 // pred_fallthru
      _
    %p124 = scmp.lt.s32.totalorder %s8, 2
    // Predicated region
    $region17: #{global_style_transformer.1} parent=5 // pred_check
      %p125 = pneg %p124
    $region18: #{global_style_transformer.1} parent=5 // pred_check_branch
      %127 = sbr.rel (%p125) target = $region20
    $region19: #{global_style_transformer.1} parent=5 // pred_region
      // Predicated region
      $region21: #{global_style_transformer.1} parent=19 // pred_check
        %p128 = pneg %p68
      $region22: #{global_style_transformer.1} parent=19 // pred_check_branch
        %130 = sbr.rel (%p128) target = $region24
      $region23: #{global_style_transformer.1} parent=19 // pred_region
        %p131 = scmp.lt.s32.totalorder %s15, 0
        %s132 = scalar_select %p131, %s15, 0
        %p133 = scmp.lt.s32.totalorder %s16, 1
        %s134 = scalar_select %p133, %s16, 1
        %s135 = smul.addr %s132, 2
        %s136 = sadd.s32 %s134, %s135
        %s137 = smul.addr %s136, 8
        %s138 = scalar_lea.vmem %s1, %s137
      $region24: #{global_style_transformer.1} parent=19 // pred_fallthru
        _
    $region20: #{global_style_transformer.1} parent=5 // pred_fallthru
      _
    %p139 = scmp.le.s32.totalorder 1, %s8
    %p140 = scmp.lt.s32.totalorder %s8, 3
    %p141 = pnand %p139, %p140
    %p142 = pneg %p141
    // Predicated region
    $region25: #{global_style_transformer.1} parent=5 // pred_check
      _
    $region26: #{global_style_transformer.1} parent=5 // pred_check_branch
      %144 = sbr.rel (%p141) target = $region28
    $region27: #{global_style_transformer.1} parent=5 // pred_region
      %s145 = ssub.s32 %s8, 1
      %p146 = scmp.lt.s32.totalorder %s17, 0
      %s147 = scalar_select %p146, %s17, 0
      %s148 = smul.addr %s147, 8
      %s149 = scalar_lea.vmem %s0, %s148
      %p150 = pneg %p46
      %p151 = pneg %p43
      %p152 = scmp.lt.s32.totalorder %s17, 0
      %s153 = scalar_select %p152, %s17, 0
      %p154 = scmp.lt.s32.totalorder %s18, 1
      %s155 = scalar_select %p154, %s18, 1
      %s156 = smul.addr %s153, 2
      %s157 = sadd.s32 %s155, %s156
      %s158 = smul.addr %s157, 8
      %s159 = scalar_lea.vmem %s1, %s158
      %p160 = pneg %p74
      %p161 = pneg %p71
      %p162 = pneg %p102
      %p163 = pneg %p99
      %p164 = scmp.lt.s32.totalorder %s17, 0
      %s165 = scalar_select %p164, %s17, 0
      %p166 = scmp.lt.s32.totalorder %s18, 1
      %s167 = scalar_select %p166, %s18, 1
      %s168 = smul.addr %s165, 2
      %s169 = sadd.s32 %s167, %s168
      %s170 = smul.addr %s169, 8
      %s171 = scalar_lea.vmem %s2, %s170
      %p172 = scmp.lt.s32.totalorder %s17, 0
      %s173 = scalar_select %p172, %s17, 0
      %s174 = smul.addr %s173, 8
      %s175 = scalar_lea.vmem %s0, %s174
      %p176 = scmp.lt.s32.totalorder %s17, 0
      %s177 = scalar_select %p176, %s17, 0
      %p178 = scmp.lt.s32.totalorder %s18, 1
      %s179 = scalar_select %p178, %s18, 1
      %s180 = smul.addr %s177, 2
      %s181 = sadd.s32 %s179, %s180
      %s182 = smul.addr %s181, 8
      %s183 = scalar_lea.vmem %s1, %s182
      %p184 = scmp.lt.s32.totalorder %s17, 0
      %s185 = scalar_select %p184, %s17, 0
      %p186 = scmp.lt.s32.totalorder %s18, 1
      %s187 = scalar_select %p186, %s18, 1
      %s188 = smul.addr %s185, 2
      %s189 = sadd.s32 %s187, %s188
      %s190 = smul.addr %s189, 8
      %s191 = scalar_lea.vmem %s2, %s190
      %v192 = vld [vmem:[%s183] sm:$0xff]
      %v193 = vld [vmem:[%s175] sm:$0xff]
      %195 = vset.pattern.permute.xlu0 0
      %196 = vperm.xlu0 %195, %v193
      %v197 = vpop.permute.xlu0 %196
      %v199 = vmul.f32 %v197, %v192
      %200 = vset.pattern.permute.xlu0 1
      %201 = vperm.xlu0 %200, %v193
      %v202 = vpop.permute.xlu0 %201
      %v204 = vadd.f32 %v199, %v202
      %205 = vst [vmem:[%s191] sm:$0xff] %v204
      %p206 = scmp.lt.s32.totalorder %s17, 0
      %s207 = scalar_select %p206, %s17, 0
      %p208 = scmp.lt.s32.totalorder %s18, 1
      %s209 = scalar_select %p208, %s18, 1
      %s210 = smul.addr %s207, 2
      %s211 = sadd.s32 %s209, %s210
      %s212 = smul.addr %s211, 8
      %s213 = scalar_lea.vmem %s2, %s212
      // Predicated region
      $region29: #{global_style_transformer.1} parent=27 // pred_check
        %p214 = pneg %p99
      $region30: #{global_style_transformer.1} parent=27 // pred_check_branch
        %216 = sbr.rel (%p214) target = $region32
      $region31: #{global_style_transformer.1} parent=27 // pred_region
        _
      $region32: #{global_style_transformer.1} parent=27 // pred_fallthru
        _
    $region28: #{global_style_transformer.1} parent=5 // pred_fallthru
      _
    %p217 = scmp.le.s32.totalorder 2, %s8
    // Predicated region
    $region33: #{global_style_transformer.1} parent=5 // pred_check
      %p218 = pneg %p217
    $region34: #{global_style_transformer.1} parent=5 // pred_check_branch
      %220 = sbr.rel (%p218) target = $region36
    $region35: #{global_style_transformer.1} parent=5 // pred_region
      %s221 = ssub.s32 %s8, 2
      // Predicated region
      $region37: #{global_style_transformer.1} parent=35 // pred_check
        %p222 = pneg %p105
      $region38: #{global_style_transformer.1} parent=35 // pred_check_branch
        %224 = sbr.rel (%p222) target = $region40
      $region39: #{global_style_transformer.1} parent=35 // pred_region
        %p225 = scmp.lt.s32.totalorder %s19, 0
        %s226 = scalar_select %p225, %s19, 0
        %p227 = scmp.lt.s32.totalorder %s20, 1
        %s228 = scalar_select %p227, %s20, 1
        %s229 = smul.addr %s226, 2
        %s230 = sadd.s32 %s228, %s229
        %s231 = smul.addr %s230, 8
        %s232 = scalar_lea.vmem %s2, %s231
      $region40: #{global_style_transformer.1} parent=35 // pred_fallthru
        _
    $region36: #{global_style_transformer.1} parent=5 // pred_fallthru
      _
  $region6: #{global_style_transformer.1} parent=0 // loop_footer
    %s12 = sadd.s32 1, %s8
  $region7: #{global_style_transformer.1} parent=0 // loop_footer_branch
    %7 = sbr.rel target = $region3
  $region8: #{global_style_transformer.1} parent=0 // loop_exit
    _

</llo_original>
